<compile_context>
chip_gen: v5e
topology: v5e:2x2
jax: 0.10.0
libtpu: 0.0.40
codegen_flags: <defaults>
</compile_context>

<pallas_src>
import functools

import numpy as np
import jax
import jax.numpy as jnp
from jax import lax
from jax.experimental import pallas as pl
from jax.experimental.pallas import tpu as pltpu

INPUT_SIZE = 2
HIDDEN_SIZE = 7
OUTPUT_SIZE = 1
NUM_LAYERS = 10

PAD_IN = 8      # padded contraction dim (sublanes of each weight tile)
PAD_F = 128     # padded feature / out dim (lanes)
NEG_SLOPE = 0.01


def _mlp_kernel(x_ref, w_ref, o_ref):
    # x_ref: [TB, PAD_F]   w_ref: [NUM_LAYERS, PAD_IN, PAD_F]   o_ref: [TB, PAD_F]
    def body(l, x):
        # Only the first PAD_IN lanes of the activation carry real features;
        # weights are stored transposed (in, out) so y = x @ W.T of the module.
        y = jnp.dot(x[:, :PAD_IN], w_ref[l], preferred_element_type=jnp.float32)
        return jnp.where(y > 0, y, NEG_SLOPE * y)   # leaky_relu(0.01)

    x = lax.fori_loop(0, NUM_LAYERS, body, x_ref[...], unroll=True)
    o_ref[...] = x   # full-tile, lane-dense (128-wide) store


def pack_weights(weights):
    """Pack PyTorch-layout (out_features, in_features) matrices into a single
    [NUM_LAYERS, PAD_IN, PAD_F] stack of transposed, zero-padded weights.
    Done ONCE per model, outside the per-call hot path."""
    w_stack = np.zeros((NUM_LAYERS, PAD_IN, PAD_F), dtype=np.float32)
    for l, w in enumerate(weights):
        w_np = np.asarray(w, dtype=np.float32)        # (out, in)
        out_f, in_f = w_np.shape
        w_stack[l, :in_f, :out_f] = w_np.T
    return jnp.asarray(w_stack)


def _round_up(n, m):
    return ((n + m - 1) // m) * m


@functools.partial(jax.jit, static_argnames=("tile_b",))
def deep_mlp_forward(x, w_stack, *, tile_b=256):
    """x: [B, INPUT_SIZE] float32.  w_stack: output of pack_weights()."""
    B, in_f = x.shape

    if B <= tile_b:
        # Single-tile path: no grid -> no per-step pipeline bookkeeping or
        # double-buffering; both operands live fully in VMEM.
        pb = max(8, _round_up(B, 8))
        x_pad = jnp.zeros((pb, PAD_F), jnp.float32).at[:B, :in_f].set(
            x.astype(jnp.float32))
        out_pad = pl.pallas_call(
            _mlp_kernel,
            out_shape=jax.ShapeDtypeStruct((pb, PAD_F), jnp.float32),
            in_specs=[
                pl.BlockSpec(memory_space=pltpu.MemorySpace.VMEM),
                pl.BlockSpec(memory_space=pltpu.MemorySpace.VMEM),
            ],
            out_specs=pl.BlockSpec(memory_space=pltpu.MemorySpace.VMEM),
        )(x_pad, w_stack)
    else:
        # Batch-tiled path: grid over batch, marked "parallel" so it shards
        # across TensorCores (v7x megacore).  The 40 KiB weight stack maps to
        # the same block every step and stays VMEM-resident.
        pb = _round_up(B, tile_b)
        x_pad = jnp.zeros((pb, PAD_F), jnp.float32).at[:B, :in_f].set(
            x.astype(jnp.float32))
        out_pad = pl.pallas_call(
            _mlp_kernel,
            out_shape=jax.ShapeDtypeStruct((pb, PAD_F), jnp.float32),
            grid_spec=pltpu.PrefetchScalarGridSpec(
                num_scalar_prefetch=0,
                grid=(pb // tile_b,),
                in_specs=[
                    pl.BlockSpec((tile_b, PAD_F), lambda b: (b, 0)),
                    pl.BlockSpec((NUM_LAYERS, PAD_IN, PAD_F),
                                 lambda b: (0, 0, 0)),
                ],
                out_specs=pl.BlockSpec((tile_b, PAD_F), lambda b: (b, 0)),
            ),
            compiler_params=pltpu.CompilerParams(
                dimension_semantics=("parallel",),
                # Tiny footprint; stays well inside v7x's 64 MiB VMEM.
                vmem_limit_bytes=32 * 1024 * 1024,
            ),
        )(x_pad, w_stack)

    return out_pad[:B, :OUTPUT_SIZE]


def _init_weights(key):
    """Deterministic uniform(-1, 1) weights, PyTorch (out_features, in_features) layout."""
    dims = [INPUT_SIZE] + [HIDDEN_SIZE] * (NUM_LAYERS - 1) + [OUTPUT_SIZE]
    weights = []
    for l in range(NUM_LAYERS):
        key, sub = jax.random.split(key)
        w = jax.random.uniform(sub, (dims[l + 1], dims[l]),
                               minval=-1.0, maxval=1.0, dtype=jnp.float32)
        weights.append(w)
    return weights


def _reference_forward(x, weights):
    """Pure-JAX reference matching the PyTorch forward."""
    y = x.astype(jnp.float32)
    for w in weights:
        y = y @ w.T
        y = jnp.where(y > 0, y, NEG_SLOPE * y)
    return y


if __name__ == "__main__":
    key = jax.random.PRNGKey(0)
    key, xk, xk2 = jax.random.split(key, 3)

    weights = _init_weights(key)
    w_stack = pack_weights(weights)   # packed ONCE, outside the hot path

    # Small batch (exercises the grid-free single-tile path).
    batch = 2
    x = jax.random.normal(xk, (batch, INPUT_SIZE), dtype=jnp.float32)
    out = jax.block_until_ready(deep_mlp_forward(x, w_stack))
    ref = _reference_forward(x, weights)
    assert out.shape == (batch, OUTPUT_SIZE), out.shape
    assert jnp.allclose(out, ref, atol=1e-5, rtol=1e-5), (out, ref)

    # Larger batch (exercises the batch-tiled "parallel" grid path).
    big_batch = 600
    xb = jax.random.normal(xk2, (big_batch, INPUT_SIZE), dtype=jnp.float32)
    out_b = jax.block_until_ready(deep_mlp_forward(xb, w_stack, tile_b=256))
    ref_b = _reference_forward(xb, weights)
    assert out_b.shape == (big_batch, OUTPUT_SIZE), out_b.shape
    assert jnp.allclose(out_b, ref_b, atol=1e-4, rtol=1e-4), (
        float(jnp.max(jnp.abs(out_b - ref_b))))

    print("KERNEL_OK")
</pallas_src>

<mosaic_0001>
module attributes {stable_mosaic.version = 11 : i64} {
  func.func @_mlp_kernel(%arg0: memref<8x128xf32, #tpu.memory_space<vmem>>, %arg1: memref<10x8x128xf32, #tpu.memory_space<vmem>>, %arg2: memref<8x128xf32, #tpu.memory_space<vmem>>) attributes {dimension_semantics = [], scalar_prefetch = 0 : i64, scratch_operands = 0 : i64, tpu.core_type = #tpu.core_type<tc>} {
    %c0 = arith.constant 0 : index
    %c0_0 = arith.constant 0 : index
    %0 = vector.load %arg0[%c0, %c0_0] : memref<8x128xf32, #tpu.memory_space<vmem>>, vector<8x128xf32>
    %c0_i32 = arith.constant 0 : i32
    %1 = vector.extract_strided_slice %0 {offsets = [0, 0], sizes = [8, 8], strides = [1, 1]} : vector<8x128xf32> to vector<8x8xf32>
    %2 = arith.index_cast %c0_i32 : i32 to index
    %c0_1 = arith.constant 0 : index
    %c0_2 = arith.constant 0 : index
    %3 = vector.load %arg1[%2, %c0_1, %c0_2] : memref<10x8x128xf32, #tpu.memory_space<vmem>>, vector<1x8x128xf32>
    %4 = vector.shape_cast %3 : vector<1x8x128xf32> to vector<8x128xf32>
    %cst = arith.constant dense<0.000000e+00> : vector<8x128xf32>
    %5 = tpu.matmul %1, %4, %cst {dimension_numbers = #tpu.dot_dimension_numbers<[1], [0], [0], [1], [0, 0, 1, 1], [], []>} : vector<8x8xf32>, vector<8x128xf32>, vector<8x128xf32> -> vector<8x128xf32>
    %cst_3 = arith.constant 0.000000e+00 : f32
    %6 = vector.broadcast %cst_3 : f32 to vector<8x128xf32>
    %7 = arith.cmpf ogt, %5, %6 : vector<8x128xf32>
    %cst_4 = arith.constant 0.00999999977 : f32
    %8 = vector.broadcast %cst_4 : f32 to vector<8x128xf32>
    %9 = arith.mulf %8, %5 : vector<8x128xf32>
    %10 = arith.select %7, %5, %9 : vector<8x128xi1>, vector<8x128xf32>
    %c1_i32 = arith.constant 1 : i32
    %11 = vector.extract_strided_slice %10 {offsets = [0, 0], sizes = [8, 8], strides = [1, 1]} : vector<8x128xf32> to vector<8x8xf32>
    %12 = arith.index_cast %c1_i32 : i32 to index
    %c0_5 = arith.constant 0 : index
    %c0_6 = arith.constant 0 : index
    %13 = vector.load %arg1[%12, %c0_5, %c0_6] : memref<10x8x128xf32, #tpu.memory_space<vmem>>, vector<1x8x128xf32>
    %14 = vector.shape_cast %13 : vector<1x8x128xf32> to vector<8x128xf32>
    %cst_7 = arith.constant dense<0.000000e+00> : vector<8x128xf32>
    %15 = tpu.matmul %11, %14, %cst_7 {dimension_numbers = #tpu.dot_dimension_numbers<[1], [0], [0], [1], [0, 0, 1, 1], [], []>} : vector<8x8xf32>, vector<8x128xf32>, vector<8x128xf32> -> vector<8x128xf32>
    %cst_8 = arith.constant 0.000000e+00 : f32
    %16 = vector.broadcast %cst_8 : f32 to vector<8x128xf32>
    %17 = arith.cmpf ogt, %15, %16 : vector<8x128xf32>
    %cst_9 = arith.constant 0.00999999977 : f32
    %18 = vector.broadcast %cst_9 : f32 to vector<8x128xf32>
    %19 = arith.mulf %18, %15 : vector<8x128xf32>
    %20 = arith.select %17, %15, %19 : vector<8x128xi1>, vector<8x128xf32>
    %c2_i32 = arith.constant 2 : i32
    %21 = vector.extract_strided_slice %20 {offsets = [0, 0], sizes = [8, 8], strides = [1, 1]} : vector<8x128xf32> to vector<8x8xf32>
    %22 = arith.index_cast %c2_i32 : i32 to index
    %c0_10 = arith.constant 0 : index
    %c0_11 = arith.constant 0 : index
    %23 = vector.load %arg1[%22, %c0_10, %c0_11] : memref<10x8x128xf32, #tpu.memory_space<vmem>>, vector<1x8x128xf32>
    %24 = vector.shape_cast %23 : vector<1x8x128xf32> to vector<8x128xf32>
    %cst_12 = arith.constant dense<0.000000e+00> : vector<8x128xf32>
    %25 = tpu.matmul %21, %24, %cst_12 {dimension_numbers = #tpu.dot_dimension_numbers<[1], [0], [0], [1], [0, 0, 1, 1], [], []>} : vector<8x8xf32>, vector<8x128xf32>, vector<8x128xf32> -> vector<8x128xf32>
    %cst_13 = arith.constant 0.000000e+00 : f32
    %26 = vector.broadcast %cst_13 : f32 to vector<8x128xf32>
    %27 = arith.cmpf ogt, %25, %26 : vector<8x128xf32>
    %cst_14 = arith.constant 0.00999999977 : f32
    %28 = vector.broadcast %cst_14 : f32 to vector<8x128xf32>
    %29 = arith.mulf %28, %25 : vector<8x128xf32>
    %30 = arith.select %27, %25, %29 : vector<8x128xi1>, vector<8x128xf32>
    %c3_i32 = arith.constant 3 : i32
    %31 = vector.extract_strided_slice %30 {offsets = [0, 0], sizes = [8, 8], strides = [1, 1]} : vector<8x128xf32> to vector<8x8xf32>
    %32 = arith.index_cast %c3_i32 : i32 to index
    %c0_15 = arith.constant 0 : index
    %c0_16 = arith.constant 0 : index
    %33 = vector.load %arg1[%32, %c0_15, %c0_16] : memref<10x8x128xf32, #tpu.memory_space<vmem>>, vector<1x8x128xf32>
    %34 = vector.shape_cast %33 : vector<1x8x128xf32> to vector<8x128xf32>
    %cst_17 = arith.constant dense<0.000000e+00> : vector<8x128xf32>
    %35 = tpu.matmul %31, %34, %cst_17 {dimension_numbers = #tpu.dot_dimension_numbers<[1], [0], [0], [1], [0, 0, 1, 1], [], []>} : vector<8x8xf32>, vector<8x128xf32>, vector<8x128xf32> -> vector<8x128xf32>
    %cst_18 = arith.constant 0.000000e+00 : f32
    %36 = vector.broadcast %cst_18 : f32 to vector<8x128xf32>
    %37 = arith.cmpf ogt, %35, %36 : vector<8x128xf32>
    %cst_19 = arith.constant 0.00999999977 : f32
    %38 = vector.broadcast %cst_19 : f32 to vector<8x128xf32>
    %39 = arith.mulf %38, %35 : vector<8x128xf32>
    %40 = arith.select %37, %35, %39 : vector<8x128xi1>, vector<8x128xf32>
    %c4_i32 = arith.constant 4 : i32
    %41 = vector.extract_strided_slice %40 {offsets = [0, 0], sizes = [8, 8], strides = [1, 1]} : vector<8x128xf32> to vector<8x8xf32>
    %42 = arith.index_cast %c4_i32 : i32 to index
    %c0_20 = arith.constant 0 : index
    %c0_21 = arith.constant 0 : index
    %43 = vector.load %arg1[%42, %c0_20, %c0_21] : memref<10x8x128xf32, #tpu.memory_space<vmem>>, vector<1x8x128xf32>
    %44 = vector.shape_cast %43 : vector<1x8x128xf32> to vector<8x128xf32>
    %cst_22 = arith.constant dense<0.000000e+00> : vector<8x128xf32>
    %45 = tpu.matmul %41, %44, %cst_22 {dimension_numbers = #tpu.dot_dimension_numbers<[1], [0], [0], [1], [0, 0, 1, 1], [], []>} : vector<8x8xf32>, vector<8x128xf32>, vector<8x128xf32> -> vector<8x128xf32>
    %cst_23 = arith.constant 0.000000e+00 : f32
    %46 = vector.broadcast %cst_23 : f32 to vector<8x128xf32>
    %47 = arith.cmpf ogt, %45, %46 : vector<8x128xf32>
    %cst_24 = arith.constant 0.00999999977 : f32
    %48 = vector.broadcast %cst_24 : f32 to vector<8x128xf32>
    %49 = arith.mulf %48, %45 : vector<8x128xf32>
    %50 = arith.select %47, %45, %49 : vector<8x128xi1>, vector<8x128xf32>
    %c5_i32 = arith.constant 5 : i32
    %51 = vector.extract_strided_slice %50 {offsets = [0, 0], sizes = [8, 8], strides = [1, 1]} : vector<8x128xf32> to vector<8x8xf32>
    %52 = arith.index_cast %c5_i32 : i32 to index
    %c0_25 = arith.constant 0 : index
    %c0_26 = arith.constant 0 : index
    %53 = vector.load %arg1[%52, %c0_25, %c0_26] : memref<10x8x128xf32, #tpu.memory_space<vmem>>, vector<1x8x128xf32>
    %54 = vector.shape_cast %53 : vector<1x8x128xf32> to vector<8x128xf32>
    %cst_27 = arith.constant dense<0.000000e+00> : vector<8x128xf32>
    %55 = tpu.matmul %51, %54, %cst_27 {dimension_numbers = #tpu.dot_dimension_numbers<[1], [0], [0], [1], [0, 0, 1, 1], [], []>} : vector<8x8xf32>, vector<8x128xf32>, vector<8x128xf32> -> vector<8x128xf32>
    %cst_28 = arith.constant 0.000000e+00 : f32
    %56 = vector.broadcast %cst_28 : f32 to vector<8x128xf32>
    %57 = arith.cmpf ogt, %55, %56 : vector<8x128xf32>
    %cst_29 = arith.constant 0.00999999977 : f32
    %58 = vector.broadcast %cst_29 : f32 to vector<8x128xf32>
    %59 = arith.mulf %58, %55 : vector<8x128xf32>
    %60 = arith.select %57, %55, %59 : vector<8x128xi1>, vector<8x128xf32>
    %c6_i32 = arith.constant 6 : i32
    %61 = vector.extract_strided_slice %60 {offsets = [0, 0], sizes = [8, 8], strides = [1, 1]} : vector<8x128xf32> to vector<8x8xf32>
    %62 = arith.index_cast %c6_i32 : i32 to index
    %c0_30 = arith.constant 0 : index
    %c0_31 = arith.constant 0 : index
    %63 = vector.load %arg1[%62, %c0_30, %c0_31] : memref<10x8x128xf32, #tpu.memory_space<vmem>>, vector<1x8x128xf32>
    %64 = vector.shape_cast %63 : vector<1x8x128xf32> to vector<8x128xf32>
    %cst_32 = arith.constant dense<0.000000e+00> : vector<8x128xf32>
    %65 = tpu.matmul %61, %64, %cst_32 {dimension_numbers = #tpu.dot_dimension_numbers<[1], [0], [0], [1], [0, 0, 1, 1], [], []>} : vector<8x8xf32>, vector<8x128xf32>, vector<8x128xf32> -> vector<8x128xf32>
    %cst_33 = arith.constant 0.000000e+00 : f32
    %66 = vector.broadcast %cst_33 : f32 to vector<8x128xf32>
    %67 = arith.cmpf ogt, %65, %66 : vector<8x128xf32>
    %cst_34 = arith.constant 0.00999999977 : f32
    %68 = vector.broadcast %cst_34 : f32 to vector<8x128xf32>
    %69 = arith.mulf %68, %65 : vector<8x128xf32>
    %70 = arith.select %67, %65, %69 : vector<8x128xi1>, vector<8x128xf32>
    %c7_i32 = arith.constant 7 : i32
    %71 = vector.extract_strided_slice %70 {offsets = [0, 0], sizes = [8, 8], strides = [1, 1]} : vector<8x128xf32> to vector<8x8xf32>
    %72 = arith.index_cast %c7_i32 : i32 to index
    %c0_35 = arith.constant 0 : index
    %c0_36 = arith.constant 0 : index
    %73 = vector.load %arg1[%72, %c0_35, %c0_36] : memref<10x8x128xf32, #tpu.memory_space<vmem>>, vector<1x8x128xf32>
    %74 = vector.shape_cast %73 : vector<1x8x128xf32> to vector<8x128xf32>
    %cst_37 = arith.constant dense<0.000000e+00> : vector<8x128xf32>
    %75 = tpu.matmul %71, %74, %cst_37 {dimension_numbers = #tpu.dot_dimension_numbers<[1], [0], [0], [1], [0, 0, 1, 1], [], []>} : vector<8x8xf32>, vector<8x128xf32>, vector<8x128xf32> -> vector<8x128xf32>
    %cst_38 = arith.constant 0.000000e+00 : f32
    %76 = vector.broadcast %cst_38 : f32 to vector<8x128xf32>
    %77 = arith.cmpf ogt, %75, %76 : vector<8x128xf32>
    %cst_39 = arith.constant 0.00999999977 : f32
    %78 = vector.broadcast %cst_39 : f32 to vector<8x128xf32>
    %79 = arith.mulf %78, %75 : vector<8x128xf32>
    %80 = arith.select %77, %75, %79 : vector<8x128xi1>, vector<8x128xf32>
    %c8_i32 = arith.constant 8 : i32
    %81 = vector.extract_strided_slice %80 {offsets = [0, 0], sizes = [8, 8], strides = [1, 1]} : vector<8x128xf32> to vector<8x8xf32>
    %82 = arith.index_cast %c8_i32 : i32 to index
    %c0_40 = arith.constant 0 : index
    %c0_41 = arith.constant 0 : index
    %83 = vector.load %arg1[%82, %c0_40, %c0_41] : memref<10x8x128xf32, #tpu.memory_space<vmem>>, vector<1x8x128xf32>
    %84 = vector.shape_cast %83 : vector<1x8x128xf32> to vector<8x128xf32>
    %cst_42 = arith.constant dense<0.000000e+00> : vector<8x128xf32>
    %85 = tpu.matmul %81, %84, %cst_42 {dimension_numbers = #tpu.dot_dimension_numbers<[1], [0], [0], [1], [0, 0, 1, 1], [], []>} : vector<8x8xf32>, vector<8x128xf32>, vector<8x128xf32> -> vector<8x128xf32>
    %cst_43 = arith.constant 0.000000e+00 : f32
    %86 = vector.broadcast %cst_43 : f32 to vector<8x128xf32>
    %87 = arith.cmpf ogt, %85, %86 : vector<8x128xf32>
    %cst_44 = arith.constant 0.00999999977 : f32
    %88 = vector.broadcast %cst_44 : f32 to vector<8x128xf32>
    %89 = arith.mulf %88, %85 : vector<8x128xf32>
    %90 = arith.select %87, %85, %89 : vector<8x128xi1>, vector<8x128xf32>
    %c9_i32 = arith.constant 9 : i32
    %91 = vector.extract_strided_slice %90 {offsets = [0, 0], sizes = [8, 8], strides = [1, 1]} : vector<8x128xf32> to vector<8x8xf32>
    %92 = arith.index_cast %c9_i32 : i32 to index
    %c0_45 = arith.constant 0 : index
    %c0_46 = arith.constant 0 : index
    %93 = vector.load %arg1[%92, %c0_45, %c0_46] : memref<10x8x128xf32, #tpu.memory_space<vmem>>, vector<1x8x128xf32>
    %94 = vector.shape_cast %93 : vector<1x8x128xf32> to vector<8x128xf32>
    %cst_47 = arith.constant dense<0.000000e+00> : vector<8x128xf32>
    %95 = tpu.matmul %91, %94, %cst_47 {dimension_numbers = #tpu.dot_dimension_numbers<[1], [0], [0], [1], [0, 0, 1, 1], [], []>} : vector<8x8xf32>, vector<8x128xf32>, vector<8x128xf32> -> vector<8x128xf32>
    %cst_48 = arith.constant 0.000000e+00 : f32
    %96 = vector.broadcast %cst_48 : f32 to vector<8x128xf32>
    %97 = arith.cmpf ogt, %95, %96 : vector<8x128xf32>
    %cst_49 = arith.constant 0.00999999977 : f32
    %98 = vector.broadcast %cst_49 : f32 to vector<8x128xf32>
    %99 = arith.mulf %98, %95 : vector<8x128xf32>
    %100 = arith.select %97, %95, %99 : vector<8x128xi1>, vector<8x128xf32>
    %c10_i32 = arith.constant 10 : i32
    %c0_50 = arith.constant 0 : index
    %c0_51 = arith.constant 0 : index
    %101 = vector.load %arg2[%c0_50, %c0_51] : memref<8x128xf32, #tpu.memory_space<vmem>>, vector<8x128xf32>
    tpu.vector_store %arg2[%c0_50, %c0_51], %100 {strides = array<i32>} : memref<8x128xf32, #tpu.memory_space<vmem>>, vector<8x128xf32>,
    return
  }
}

</mosaic_0001>

<llo_original>
// kernel: deep_mlp_forward.1
$region0: #{deep_mlp_forward.1}
  #allocation0 [shape = 'u32[]', space=smem, size = 0x4, offset = 0x4, fixed_abs, tag = 'smem constant byte address 0x4 - core index']
  #allocation1 [shape = 'u32[72,128]{1,0:T(1,128)}', space=vmem, size = 0x9000, scoped, tag = 'internal scratch']
  %s0 = inlined_call_operand.vmem [shape: f32[8,128], index: 0, kind: input, shape index: {}]
  %s1 = inlined_call_operand.hbm [shape: f32[10,8,128], index: 1, kind: input, shape index: {}]
  %s2 = inlined_call_operand.vmem [shape: f32[8,128], index: 2, kind: output, shape index: {}]
  %s3 = sld [smem:[#allocation0]]
  $region22: #{deep_mlp_forward.1} parent=0
    _
  %s5 = ssub.s32 1, %s3
  %s6 = scalar_select 0, %s5, %s3
  $region1: #{deep_mlp_forward.1} parent=0
    #allocation2 [shape = 'u8[40960]{0}', space=vmem, size = 0xa000, scoped, tag = 'input window, operand 1, single buffered']
    #allocation3 [shape = 's32[1]{0}', space=sflag, size = 0x4, scoped, tag = 'scoped memory for deep_mlp_forward.1']
    %7 = vsyncpa [#allocation3], 0
    // Predicated region
    $region2: #{deep_mlp_forward.1} parent=1 // pred_check
      _
    $region3: #{deep_mlp_forward.1} parent=1 // pred_check_branch
      %9 = sbr.rel (0) target = $region5
    $region4: #{deep_mlp_forward.1} parent=1 // pred_region
      _
    $region5: #{deep_mlp_forward.1} parent=1 // pred_fallthru
      _
    // Predicated region
    $region6: #{deep_mlp_forward.1} parent=1 // pred_check
      _
    $region7: #{deep_mlp_forward.1} parent=1 // pred_check_branch
      %11 = sbr.rel (0) target = $region9
    $region8: #{deep_mlp_forward.1} parent=1 // pred_region
      %13 = vsyncadd [#allocation3], 0
      %s14 = sshll.u32 %s1, 4
      %s15 = int_to_ptr.hbm [resolvable:$true] %s14
      %s16 = sshll.u32 [#allocation2], 4
      %s17 = int_to_ptr.vmem [resolvable:$true] %s16
      %22 = dma.hbm_to_vmem [thread:$0]  %s15, 1280, %s17, [#allocation3], 128, 128, 8
    $region9: #{deep_mlp_forward.1} parent=1 // pred_fallthru
      _
    // Predicated region
    $region10: #{deep_mlp_forward.1} parent=1 // pred_check
      _
    $region11: #{deep_mlp_forward.1} parent=1 // pred_check_branch
      %24 = sbr.rel (0) target = $region13
    $region12: #{deep_mlp_forward.1} parent=1 // pred_region
      %26 = dma.done [#allocation3], 1280
    $region13: #{deep_mlp_forward.1} parent=1 // pred_fallthru
      _
    %v27 = vld [vmem:[%s0] sm:$0xff]
    %v28 = vld [vmem:[#allocation2] sm:$0xff]
    %vm29 = vcmask 64512
    %v31 = vsel %vm29, %v27, 0
    %33 = vmatpush.msra.mxu0 0.0
    %34 = vmatpush.msra.mxu0 0.0
    %35 = vmatpush.msra.mxu0 0.0
    %36 = vmatpush.msra.mxu0 0.0
    %37 = vmatpush.msra.mxu0 0.0
    %38 = vmatpush.msra.mxu0 0.0
    %39 = vmatpush.msra.mxu0 0.0
    %40 = vmatpush.msra.mxu0 0.0
    %41 = vmatpush.msra.mxu0 0.0
    %42 = vmatpush.msra.mxu0 0.0
    %43 = vmatpush.msra.mxu0 0.0
    %44 = vmatpush.msra.mxu0 0.0
    %45 = vmatpush.msra.mxu0 0.0
    %46 = vmatpush.msra.mxu0 0.0
    %47 = vmatpush.msra.mxu0 0.0
    %48 = vmatpush.msra.mxu0 %v28
    %49 = vmatmul.f32.gmra.mxu0 %v31
    %v50 = vpop.f32.mrf.mxu0
    %v51 = vadd.f32 0.0, %v50
    %52 = vdwg.mxu0
    %vm53 = vcmp.gt.f32.partialorder %v51, 0.0
    %v54 = vmul.f32 %v51, 0.01
    %v55 = vsel %vm53, %v51, %v54
    %s56 = scalar_lea.vmem [#allocation2], 8
    %v57 = vld [vmem:[%s56] sm:$0xff]
    %v59 = vsel %vm29, %v55, 0
    %61 = vmatpush.msra.mxu0 0.0
    %62 = vmatpush.msra.mxu0 0.0
    %63 = vmatpush.msra.mxu0 0.0
    %64 = vmatpush.msra.mxu0 0.0
    %65 = vmatpush.msra.mxu0 0.0
    %66 = vmatpush.msra.mxu0 0.0
    %67 = vmatpush.msra.mxu0 0.0
    %68 = vmatpush.msra.mxu0 0.0
    %69 = vmatpush.msra.mxu0 0.0
    %70 = vmatpush.msra.mxu0 0.0
    %71 = vmatpush.msra.mxu0 0.0
    %72 = vmatpush.msra.mxu0 0.0
    %73 = vmatpush.msra.mxu0 0.0
    %74 = vmatpush.msra.mxu0 0.0
    %75 = vmatpush.msra.mxu0 0.0
    %76 = vmatpush.msra.mxu0 %v57
    %77 = vmatmul.f32.gmra.mxu0 %v59
    %v78 = vpop.f32.mrf.mxu0
    %v79 = vadd.f32 0.0, %v78
    %80 = vdwg.mxu0
    %vm81 = vcmp.gt.f32.partialorder %v79, 0.0
    %v82 = vmul.f32 %v79, 0.01
    %v83 = vsel %vm81, %v79, %v82
    %s84 = scalar_lea.vmem [#allocation2], 16
    %v85 = vld [vmem:[%s84] sm:$0xff]
    %v87 = vsel %vm29, %v83, 0
    %89 = vmatpush.msra.mxu0 0.0
    %90 = vmatpush.msra.mxu0 0.0
    %91 = vmatpush.msra.mxu0 0.0
    %92 = vmatpush.msra.mxu0 0.0
    %93 = vmatpush.msra.mxu0 0.0
    %94 = vmatpush.msra.mxu0 0.0
    %95 = vmatpush.msra.mxu0 0.0
    %96 = vmatpush.msra.mxu0 0.0
    %97 = vmatpush.msra.mxu0 0.0
    %98 = vmatpush.msra.mxu0 0.0
    %99 = vmatpush.msra.mxu0 0.0
    %100 = vmatpush.msra.mxu0 0.0
    %101 = vmatpush.msra.mxu0 0.0
    %102 = vmatpush.msra.mxu0 0.0
    %103 = vmatpush.msra.mxu0 0.0
    %104 = vmatpush.msra.mxu0 %v85
    %105 = vmatmul.f32.gmra.mxu0 %v87
    %v106 = vpop.f32.mrf.mxu0
    %v107 = vadd.f32 0.0, %v106
    %108 = vdwg.mxu0
    %vm109 = vcmp.gt.f32.partialorder %v107, 0.0
    %v110 = vmul.f32 %v107, 0.01
    %v111 = vsel %vm109, %v107, %v110
    %s112 = scalar_lea.vmem [#allocation2], 24
    %v113 = vld [vmem:[%s112] sm:$0xff]
    %v115 = vsel %vm29, %v111, 0
    %117 = vmatpush.msra.mxu0 0.0
    %118 = vmatpush.msra.mxu0 0.0
    %119 = vmatpush.msra.mxu0 0.0
    %120 = vmatpush.msra.mxu0 0.0
    %121 = vmatpush.msra.mxu0 0.0
    %122 = vmatpush.msra.mxu0 0.0
    %123 = vmatpush.msra.mxu0 0.0
    %124 = vmatpush.msra.mxu0 0.0
    %125 = vmatpush.msra.mxu0 0.0
    %126 = vmatpush.msra.mxu0 0.0
    %127 = vmatpush.msra.mxu0 0.0
    %128 = vmatpush.msra.mxu0 0.0
    %129 = vmatpush.msra.mxu0 0.0
    %130 = vmatpush.msra.mxu0 0.0
    %131 = vmatpush.msra.mxu0 0.0
    %132 = vmatpush.msra.mxu0 %v113
    %133 = vmatmul.f32.gmra.mxu0 %v115
    %v134 = vpop.f32.mrf.mxu0
    %v135 = vadd.f32 0.0, %v134
    %136 = vdwg.mxu0
    %vm137 = vcmp.gt.f32.partialorder %v135, 0.0
    %v138 = vmul.f32 %v135, 0.01
    %v139 = vsel %vm137, %v135, %v138
    %s140 = scalar_lea.vmem [#allocation2], 32
    %v141 = vld [vmem:[%s140] sm:$0xff]
    %v143 = vsel %vm29, %v139, 0
    %145 = vmatpush.msra.mxu0 0.0
    %146 = vmatpush.msra.mxu0 0.0
    %147 = vmatpush.msra.mxu0 0.0
    %148 = vmatpush.msra.mxu0 0.0
    %149 = vmatpush.msra.mxu0 0.0
    %150 = vmatpush.msra.mxu0 0.0
    %151 = vmatpush.msra.mxu0 0.0
    %152 = vmatpush.msra.mxu0 0.0
    %153 = vmatpush.msra.mxu0 0.0
    %154 = vmatpush.msra.mxu0 0.0
    %155 = vmatpush.msra.mxu0 0.0
    %156 = vmatpush.msra.mxu0 0.0
    %157 = vmatpush.msra.mxu0 0.0
    %158 = vmatpush.msra.mxu0 0.0
    %159 = vmatpush.msra.mxu0 0.0
    %160 = vmatpush.msra.mxu0 %v141
    %161 = vmatmul.f32.gmra.mxu0 %v143
    %v162 = vpop.f32.mrf.mxu0
    %v163 = vadd.f32 0.0, %v162
    %164 = vdwg.mxu0
    %vm165 = vcmp.gt.f32.partialorder %v163, 0.0
    %v166 = vmul.f32 %v163, 0.01
    %v167 = vsel %vm165, %v163, %v166
    %s168 = scalar_lea.vmem [#allocation2], 40
    %v169 = vld [vmem:[%s168] sm:$0xff]
    %v171 = vsel %vm29, %v167, 0
    %173 = vmatpush.msra.mxu0 0.0
    %174 = vmatpush.msra.mxu0 0.0
    %175 = vmatpush.msra.mxu0 0.0
    %176 = vmatpush.msra.mxu0 0.0
    %177 = vmatpush.msra.mxu0 0.0
    %178 = vmatpush.msra.mxu0 0.0
    %179 = vmatpush.msra.mxu0 0.0
    %180 = vmatpush.msra.mxu0 0.0
    %181 = vmatpush.msra.mxu0 0.0
    %182 = vmatpush.msra.mxu0 0.0
    %183 = vmatpush.msra.mxu0 0.0
    %184 = vmatpush.msra.mxu0 0.0
    %185 = vmatpush.msra.mxu0 0.0
    %186 = vmatpush.msra.mxu0 0.0
    %187 = vmatpush.msra.mxu0 0.0
    %188 = vmatpush.msra.mxu0 %v169
    %189 = vmatmul.f32.gmra.mxu0 %v171
    %v190 = vpop.f32.mrf.mxu0
    %v191 = vadd.f32 0.0, %v190
    %192 = vdwg.mxu0
    %vm193 = vcmp.gt.f32.partialorder %v191, 0.0
    %v194 = vmul.f32 %v191, 0.01
    %v195 = vsel %vm193, %v191, %v194
    %s196 = scalar_lea.vmem [#allocation2], 48
    %v197 = vld [vmem:[%s196] sm:$0xff]
    %v199 = vsel %vm29, %v195, 0
    %201 = vmatpush.msra.mxu0 0.0
    %202 = vmatpush.msra.mxu0 0.0
    %203 = vmatpush.msra.mxu0 0.0
    %204 = vmatpush.msra.mxu0 0.0
    %205 = vmatpush.msra.mxu0 0.0
    %206 = vmatpush.msra.mxu0 0.0
    %207 = vmatpush.msra.mxu0 0.0
    %208 = vmatpush.msra.mxu0 0.0
    %209 = vmatpush.msra.mxu0 0.0
    %210 = vmatpush.msra.mxu0 0.0
    %211 = vmatpush.msra.mxu0 0.0
    %212 = vmatpush.msra.mxu0 0.0
    %213 = vmatpush.msra.mxu0 0.0
    %214 = vmatpush.msra.mxu0 0.0
    %215 = vmatpush.msra.mxu0 0.0
    %216 = vmatpush.msra.mxu0 %v197
    %217 = vmatmul.f32.gmra.mxu0 %v199
    %v218 = vpop.f32.mrf.mxu0
    %v219 = vadd.f32 0.0, %v218
    %220 = vdwg.mxu0
    %vm221 = vcmp.gt.f32.partialorder %v219, 0.0
    %v222 = vmul.f32 %v219, 0.01
    %v223 = vsel %vm221, %v219, %v222
    %s224 = scalar_lea.vmem [#allocation2], 56
    %v225 = vld [vmem:[%s224] sm:$0xff]
    %v227 = vsel %vm29, %v223, 0
    %229 = vmatpush.msra.mxu0 0.0
    %230 = vmatpush.msra.mxu0 0.0
    %231 = vmatpush.msra.mxu0 0.0
    %232 = vmatpush.msra.mxu0 0.0
    %233 = vmatpush.msra.mxu0 0.0
    %234 = vmatpush.msra.mxu0 0.0
    %235 = vmatpush.msra.mxu0 0.0
    %236 = vmatpush.msra.mxu0 0.0
    %237 = vmatpush.msra.mxu0 0.0
    %238 = vmatpush.msra.mxu0 0.0
    %239 = vmatpush.msra.mxu0 0.0
    %240 = vmatpush.msra.mxu0 0.0
    %241 = vmatpush.msra.mxu0 0.0
    %242 = vmatpush.msra.mxu0 0.0
    %243 = vmatpush.msra.mxu0 0.0
    %244 = vmatpush.msra.mxu0 %v225
    %245 = vmatmul.f32.gmra.mxu0 %v227
    %v246 = vpop.f32.mrf.mxu0
    %v247 = vadd.f32 0.0, %v246
    %248 = vdwg.mxu0
    %vm249 = vcmp.gt.f32.partialorder %v247, 0.0
    %v250 = vmul.f32 %v247, 0.01
    %v251 = vsel %vm249, %v247, %v250
    %s252 = scalar_lea.vmem [#allocation2], 64
    %v253 = vld [vmem:[%s252] sm:$0xff]
    %v255 = vsel %vm29, %v251, 0
    %257 = vmatpush.msra.mxu0 0.0
    %258 = vmatpush.msra.mxu0 0.0
    %259 = vmatpush.msra.mxu0 0.0
    %260 = vmatpush.msra.mxu0 0.0
    %261 = vmatpush.msra.mxu0 0.0
    %262 = vmatpush.msra.mxu0 0.0
    %263 = vmatpush.msra.mxu0 0.0
    %264 = vmatpush.msra.mxu0 0.0
    %265 = vmatpush.msra.mxu0 0.0
    %266 = vmatpush.msra.mxu0 0.0
    %267 = vmatpush.msra.mxu0 0.0
    %268 = vmatpush.msra.mxu0 0.0
    %269 = vmatpush.msra.mxu0 0.0
    %270 = vmatpush.msra.mxu0 0.0
    %271 = vmatpush.msra.mxu0 0.0
    %272 = vmatpush.msra.mxu0 %v253
    %273 = vmatmul.f32.gmra.mxu0 %v255
    %v274 = vpop.f32.mrf.mxu0
    %v275 = vadd.f32 0.0, %v274
    %276 = vdwg.mxu0
    %vm277 = vcmp.gt.f32.partialorder %v275, 0.0
    %v278 = vmul.f32 %v275, 0.01
    %v279 = vsel %vm277, %v275, %v278
    %s280 = scalar_lea.vmem [#allocation2], 72
    %v281 = vld [vmem:[%s280] sm:$0xff]
    %v283 = vsel %vm29, %v279, 0
    %285 = vmatpush.msra.mxu0 0.0
    %286 = vmatpush.msra.mxu0 0.0
    %287 = vmatpush.msra.mxu0 0.0
    %288 = vmatpush.msra.mxu0 0.0
    %289 = vmatpush.msra.mxu0 0.0
    %290 = vmatpush.msra.mxu0 0.0
    %291 = vmatpush.msra.mxu0 0.0
    %292 = vmatpush.msra.mxu0 0.0
    %293 = vmatpush.msra.mxu0 0.0
    %294 = vmatpush.msra.mxu0 0.0
    %295 = vmatpush.msra.mxu0 0.0
    %296 = vmatpush.msra.mxu0 0.0
    %297 = vmatpush.msra.mxu0 0.0
    %298 = vmatpush.msra.mxu0 0.0
    %299 = vmatpush.msra.mxu0 0.0
    %300 = vmatpush.msra.mxu0 %v281
    %301 = vmatmul.f32.gmra.mxu0 %v283
    %v302 = vpop.f32.mrf.mxu0
    %v303 = vadd.f32 0.0, %v302
    %304 = vdwg.mxu0
    %vm305 = vcmp.gt.f32.partialorder %v303, 0.0
    %v306 = vmul.f32 %v303, 0.01
    %v307 = vsel %vm305, %v303, %v306
    %308 = vst [vmem:[%s2] sm:$0xff] %v307
    // Predicated region
    $region14: #{deep_mlp_forward.1} parent=1 // pred_check
      _
    $region15: #{deep_mlp_forward.1} parent=1 // pred_check_branch
      %310 = sbr.rel (0) target = $region17
    $region16: #{deep_mlp_forward.1} parent=1 // pred_region
      _
    $region17: #{deep_mlp_forward.1} parent=1 // pred_fallthru
      _
    // Predicated region
    $region18: #{deep_mlp_forward.1} parent=1 // pred_check
      _
    $region19: #{deep_mlp_forward.1} parent=1 // pred_check_branch
      %312 = sbr.rel (0) target = $region21
    $region20: #{deep_mlp_forward.1} parent=1 // pred_region
      _
    $region21: #{deep_mlp_forward.1} parent=1 // pred_fallthru
      _
    %313 = vsyncpa [#allocation3], 1

</llo_original>
